<compile_context>
chip_gen: v7x
topology: tpu7x:2x2x1
jax: 0.10.0
libtpu: 0.0.40
codegen_flags: <defaults>
</compile_context>

<pallas_src>
import functools

import jax
import jax.numpy as jnp
from jax.experimental import pallas as pl
from jax.experimental.pallas import tpu as pltpu

EXPANSION = 4
BN_EPS = 1e-5


def _round_up(a, b):
    return (a + b - 1) // b * b


@functools.lru_cache(maxsize=None)
def _vmem_limit_bytes():
    """Per-generation scoped-VMEM limit (leave headroom below physical VMEM)."""
    try:
        cap = int(pltpu.get_tpu_info().vmem_capacity_bytes)
    except Exception:
        cap = 64 * 1024 * 1024  # conservative default: v7x per-TensorCore VMEM
    return int(min(cap * 3 // 4, 96 * 1024 * 1024))


@functools.lru_cache(maxsize=None)
def _roll_matches_jnp():
    """Probe pltpu.roll's convention once (True: out[j] == in[(j - shift) % n])."""

    def _k(x_ref, o_ref):
        o_ref[...] = pltpu.roll(x_ref[...], shift=7, axis=0)

    try:
        x = jnp.tile(jnp.arange(8, dtype=jnp.float32)[:, None], (1, 128))
        y = pl.pallas_call(
            _k, out_shape=jax.ShapeDtypeStruct((8, 128), jnp.float32))(x)
        return bool(y[0, 0] == 1.0)
    except Exception:
        return True


# --------------------------------------------------------------------------
# Pallas kernels
# --------------------------------------------------------------------------
def _matmul_bias_kernel(x_ref, w_ref, b_ref, o_ref, *, relu):
    """(tm, K) @ (K, N) with resident weight; + folded-BN bias (+ReLU) epilogue."""
    y = jnp.dot(x_ref[...], w_ref[...], preferred_element_type=jnp.float32)
    y = y + b_ref[...]
    if relu:
        y = jnp.maximum(y, 0.0)
    o_ref[...] = y.astype(o_ref.dtype)


def _conv3x3_s1_kernel(x_ref, w_ref, b_ref, o_ref, xpad_ref, *,
                       h, w, c, wq, neg_roll):
    """Direct 3x3 conv, stride 1, padding 1: one K=9c MXU matmul per image.

    Padded image lives in a VMEM slab with the image starting at column 8
    (halo fill + interior copy stay aligned).  kw shifts are pltpu.roll on
    full-width row slabs, so there are no per-tap slice+reshape relayouts.
    """
    xpad_ref[...] = jnp.zeros_like(xpad_ref)      # halo + tail columns = 0
    xpad_ref[1:h + 1, 8:8 + w, :] = x_ref[0]      # aligned interior copy
    xv = xpad_ref[...]                            # (h+2, wq, c)

    def left(v, off):                             # out[..., j, :] = v[..., j + off, :]
        s = (wq - off) % wq if neg_roll else off % wq
        return pltpu.roll(v, shift=s, axis=1)

    taps = []
    for kh in range(3):
        a = xv[kh:kh + h]                         # leading-dim slice: no relayout
        for kw in range(3):
            taps.append(left(a, kw + 7))          # out[i,j] uses xpad[i+kh, j+kw+7]
    x9 = jnp.concatenate(taps, axis=-1).reshape(h * wq, 9 * c)
    y = jnp.dot(x9, w_ref[...], preferred_element_type=jnp.float32)
    y = jnp.maximum(y + b_ref[...], 0.0).reshape(h, wq, -1)
    o_ref[0] = y[:, :w, :].astype(o_ref.dtype)


def _conv3x3_s2_kernel(x_ref, w_ref, b_ref, o_ref, xpad_ref, *,
                       h, wpair, c, wq, neg_roll):
    """Direct 3x3 conv, stride 2, padding 1 (even H/W): one K=9c matmul per image.

    Input arrives column-pair packed: x[..., m, :c] = col 2m, x[..., m, c:] = col 2m+1.
    Strided access reduces to row-parity indexing (leading dim), lane-half slices
    and sublane rolls -- no strided loads, no HBM im2col.
    """
    ho = h // 2
    wo = wpair
    xpad_ref[...] = jnp.zeros_like(xpad_ref)
    xpad_ref[1:h + 1, 8:8 + wpair, :] = x_ref[0]
    xv = xpad_ref[...]                                 # (h+2, wq, 2c)
    xvr = xv.reshape((h + 2) // 2, 2, wq, 2 * c)       # row-parity split (leading dims)
    rows = (xvr[0:ho, 0],                              # kh=0: padded rows 2i
            xvr[0:ho, 1],                              # kh=1: padded rows 2i+1
            xvr[1:1 + ho, 0])                          # kh=2: padded rows 2i+2

    def left(v, off):
        s = (wq - off) % wq if neg_roll else off % wq
        return pltpu.roll(v, shift=s, axis=1)

    taps = []
    for kh in range(3):
        even = rows[kh][..., :c]                       # original even columns
        odd = rows[kh][..., c:]                        # original odd columns
        taps.append(left(odd, 7))                      # kw=0: orig col 2j-1 -> pair j-1
        taps.append(left(even, 8))                     # kw=1: orig col 2j   -> pair j
        taps.append(left(odd, 8))                      # kw=2: orig col 2j+1 -> pair j
    x9 = jnp.concatenate(taps, axis=-1).reshape(ho * wq, 9 * c)
    y = jnp.dot(x9, w_ref[...], preferred_element_type=jnp.float32)
    y = jnp.maximum(y + b_ref[...], 0.0).reshape(ho, wq, -1)
    o_ref[0] = y[:, :wo, :].astype(o_ref.dtype)


def _proj_residual_kernel(h_ref, w_ref, s_ref, ws_ref, b_ref, o_ref):
    """relu(h @ w + shortcut @ ws + bias): expansion conv + projection shortcut fused."""
    y = jnp.dot(h_ref[...], w_ref[...], preferred_element_type=jnp.float32)
    y += jnp.dot(s_ref[...], ws_ref[...], preferred_element_type=jnp.float32)
    o_ref[...] = jnp.maximum(y + b_ref[...], 0.0).astype(o_ref.dtype)


def _identity_residual_kernel(h_ref, w_ref, b_ref, r_ref, o_ref):
    """relu(h @ w + bias + residual): expansion conv + identity shortcut fused."""
    y = jnp.dot(h_ref[...], w_ref[...], preferred_element_type=jnp.float32)
    y += b_ref[...] + r_ref[...].astype(jnp.float32)
    o_ref[...] = jnp.maximum(y, 0.0).astype(o_ref.dtype)


# --------------------------------------------------------------------------
# pallas_call wrappers
# --------------------------------------------------------------------------
def _pick_tm(m, tm_max=256):
    # <=256 keeps >=2 parallel grid steps at moderate M (v7x has 2 TensorCores)
    # and bounds the per-step working set on 64-MiB-VMEM parts.
    return m if m <= tm_max else tm_max


def matmul_bias_act(x, w, bias, *, relu, out_dtype=jnp.bfloat16, tm_max=256):
    """1x1 conv: x(M,K) bf16 @ resident w(K,N) bf16 + f32 bias (+ReLU), bf16 out.
    # TODO(synk): K-tile if K*N ever exceeds the VMEM budget (not hit by ResNet 1x1s).
    """
    m, k = x.shape
    n = w.shape[1]
    tm = _pick_tm(m, tm_max)
    return pl.pallas_call(
        functools.partial(_matmul_bias_kernel, relu=relu),
        out_shape=jax.ShapeDtypeStruct((m, n), out_dtype),
        grid=(pl.cdiv(m, tm),),
        in_specs=[pl.BlockSpec((tm, k), lambda i: (i, 0)),
                  pl.BlockSpec((k, n), lambda i: (0, 0)),   # weight stays resident
                  pl.BlockSpec((1, n), lambda i: (0, 0))],
        out_specs=pl.BlockSpec((tm, n), lambda i: (i, 0)),
        compiler_params=pltpu.CompilerParams(
            dimension_semantics=("parallel",),
            vmem_limit_bytes=_vmem_limit_bytes()),
        cost_estimate=pl.CostEstimate(
            flops=2 * m * k * n, transcendentals=0,
            bytes_accessed=2 * (m * k + k * n + m * n) + 4 * n),
    )(x, w, bias)


def conv3x3_direct(x_nhwc, w_flat, bias, *, stride):
    """3x3 conv, padding 1, stride in {1, 2}; folded BN bias + ReLU; bf16 in/out."""
    n, h, w, c = x_nhwc.shape
    c_out = w_flat.shape[-1]
    ho = (h - 1) // stride + 1
    wo = (w - 1) // stride + 1
    neg_roll = _roll_matches_jnp()     # resolve roll convention outside kernel tracing

    if stride == 1:
        wq = _round_up(w + 9, 8)
        xin = x_nhwc
        x_spec = pl.BlockSpec((1, h, w, c), lambda i: (i, 0, 0, 0))
        slab = pltpu.VMEM((h + 2, wq, c), jnp.bfloat16)
        kern = functools.partial(_conv3x3_s1_kernel, h=h, w=w, c=c, wq=wq,
                                 neg_roll=neg_roll)
    elif stride == 2:
        assert h % 2 == 0 and w % 2 == 0, "stride-2 path assumes even H/W"
        wpair = w // 2
        wq = _round_up(wpair + 8, 8)
        xin = x_nhwc.reshape(n, h, wpair, 2 * c)        # column-pair packing (reshape)
        x_spec = pl.BlockSpec((1, h, wpair, 2 * c), lambda i: (i, 0, 0, 0))
        slab = pltpu.VMEM((h + 2, wq, 2 * c), jnp.bfloat16)
        kern = functools.partial(_conv3x3_s2_kernel, h=h, wpair=wpair, c=c, wq=wq,
                                 neg_roll=neg_roll)
    else:
        raise NotImplementedError("stride must be 1 or 2")  # TODO(synk): general stride

    return pl.pallas_call(
        kern,
        out_shape=jax.ShapeDtypeStruct((n, ho, wo, c_out), jnp.bfloat16),
        grid=(n,),
        in_specs=[x_spec,
                  pl.BlockSpec((9 * c, c_out), lambda i: (0, 0)),   # resident weight
                  pl.BlockSpec((1, c_out), lambda i: (0, 0))],
        out_specs=pl.BlockSpec((1, ho, wo, c_out), lambda i: (i, 0, 0, 0)),
        scratch_shapes=[slab],
        compiler_params=pltpu.CompilerParams(
            dimension_semantics=("parallel",),
            vmem_limit_bytes=_vmem_limit_bytes()),
        cost_estimate=pl.CostEstimate(
            flops=2 * n * ho * wo * 9 * c * c_out, transcendentals=0,
            bytes_accessed=2 * (n * h * w * c + 9 * c * c_out + n * ho * wo * c_out)),
    )(xin, w_flat, bias)


def proj_residual(h2, w3, xs, ws, bias, *, tm_max=256):
    """relu(h2 @ w3 + xs @ ws + bias) -- expansion conv + projection shortcut fused."""
    m, k1 = h2.shape
    k2 = xs.shape[1]
    n = w3.shape[1]
    tm = _pick_tm(m, tm_max)
    return pl.pallas_call(
        _proj_residual_kernel,
        out_shape=jax.ShapeDtypeStruct((m, n), jnp.bfloat16),
        grid=(pl.cdiv(m, tm),),
        in_specs=[pl.BlockSpec((tm, k1), lambda i: (i, 0)),
                  pl.BlockSpec((k1, n), lambda i: (0, 0)),
                  pl.BlockSpec((tm, k2), lambda i: (i, 0)),
                  pl.BlockSpec((k2, n), lambda i: (0, 0)),
                  pl.BlockSpec((1, n), lambda i: (0, 0))],
        out_specs=pl.BlockSpec((tm, n), lambda i: (i, 0)),
        compiler_params=pltpu.CompilerParams(
            dimension_semantics=("parallel",),
            vmem_limit_bytes=_vmem_limit_bytes()),
        cost_estimate=pl.CostEstimate(
            flops=2 * m * n * (k1 + k2), transcendentals=0,
            bytes_accessed=2 * (m * (k1 + k2) + (k1 + k2) * n + m * n) + 4 * n),
    )(h2, w3, xs, ws, bias)


def identity_residual(h2, w3, bias, res, *, tm_max=256):
    """relu(h2 @ w3 + bias + res) -- expansion conv + identity shortcut fused."""
    m, k1 = h2.shape
    n = w3.shape[1]
    tm = _pick_tm(m, tm_max)
    return pl.pallas_call(
        _identity_residual_kernel,
        out_shape=jax.ShapeDtypeStruct((m, n), jnp.bfloat16),
        grid=(pl.cdiv(m, tm),),
        in_specs=[pl.BlockSpec((tm, k1), lambda i: (i, 0)),
                  pl.BlockSpec((k1, n), lambda i: (0, 0)),
                  pl.BlockSpec((1, n), lambda i: (0, 0)),
                  pl.BlockSpec((tm, n), lambda i: (i, 0))],
        out_specs=pl.BlockSpec((tm, n), lambda i: (i, 0)),
        compiler_params=pltpu.CompilerParams(
            dimension_semantics=("parallel",),
            vmem_limit_bytes=_vmem_limit_bytes()),
        cost_estimate=pl.CostEstimate(
            flops=2 * m * k1 * n, transcendentals=0,
            bytes_accessed=2 * (m * k1 + k1 * n + 2 * m * n) + 4 * n),
    )(h2, w3, bias, res)


# --------------------------------------------------------------------------
# Glue: BN folding, params, forward
# --------------------------------------------------------------------------
def _fold_bn(w_kn, gamma, beta, mean, var, eps=BN_EPS):
    """Fold inference-mode BN into (bf16 weight, f32 bias).  w_kn: (K, N)."""
    scale = gamma / jnp.sqrt(var + eps)
    bias = beta - mean * scale
    w_f = (w_kn.astype(jnp.float32) * scale[None, :]).astype(jnp.bfloat16)
    return w_f, bias.reshape(1, -1).astype(jnp.float32)


def init_bottleneck_params(key, in_channels, out_channels):
    """Deterministic parameter init matching the PyTorch module's shapes."""
    c, cexp = out_channels, out_channels * EXPANSION
    keys = jax.random.split(key, 4)

    def conv_w(k, cout, cin, kh, kw):
        fan_in = cin * kh * kw
        return jax.random.normal(k, (cout, cin, kh, kw), jnp.float32) / jnp.sqrt(fan_in)

    def bn(cout):
        return (jnp.ones((cout,), jnp.float32), jnp.zeros((cout,), jnp.float32),
                jnp.zeros((cout,), jnp.float32), jnp.ones((cout,), jnp.float32))

    return {
        "w1": conv_w(keys[0], c, in_channels, 1, 1), "bn1": bn(c),
        "w2": conv_w(keys[1], c, c, 3, 3), "bn2": bn(c),
        "w3": conv_w(keys[2], cexp, c, 1, 1), "bn3": bn(cexp),
        "ws": conv_w(keys[3], cexp, in_channels, 1, 1), "bns": bn(cexp),
    }


def bottleneck_forward(x_nchw, params, in_channels, out_channels, stride=1):
    """Forward pass of BottleNeck.  Input NCHW f32, output NCHW bf16."""
    c = out_channels
    cexp = c * EXPANSION
    n, cin, h, w = x_nchw.shape
    assert cin == in_channels
    x_bf = jnp.transpose(x_nchw, (0, 2, 3, 1)).astype(jnp.bfloat16)   # NHWC bf16

    # conv1x1 + BN + ReLU
    w1, b1 = _fold_bn(params["w1"].reshape(c, cin).T, *params["bn1"])
    h1 = matmul_bias_act(x_bf.reshape(n * h * w, cin), w1, b1, relu=True)
    h1 = h1.reshape(n, h, w, c)

    # conv3x3 (stride, pad=1) + BN + ReLU  (direct kernel for stride 1 and 2)
    w2, b2 = _fold_bn(jnp.transpose(params["w2"], (2, 3, 1, 0)).reshape(9 * c, c),
                      *params["bn2"])
    h2n = conv3x3_direct(h1, w2, b2, stride=stride)
    ho, wo = h2n.shape[1], h2n.shape[2]
    m2 = n * ho * wo
    h2 = h2n.reshape(m2, c)

    # conv1x1 expansion + BN + shortcut + add + ReLU: one fused kernel
    w3, b3 = _fold_bn(params["w3"].reshape(cexp, c).T, *params["bn3"])
    if stride != 1 or cin != cexp:
        ws, bs = _fold_bn(params["ws"].reshape(cexp, cin).T, *params["bns"])
        # TODO(synk): fuse this strided subsample into proj_residual (strided index_map).
        xs = x_bf[:, ::stride, ::stride, :].reshape(m2, cin)
        out = proj_residual(h2, w3, xs, ws, b3 + bs)
    else:
        out = identity_residual(h2, w3, b3, x_bf.reshape(m2, cexp))

    return jnp.transpose(out.reshape(n, ho, wo, cexp), (0, 3, 1, 2))   # -> NCHW bf16


# --------------------------------------------------------------------------
# Pure-JAX reference mirroring the kernel dataflow (bf16 matmul inputs,
# f32 accumulation, folded BN) -- no Pallas.
# --------------------------------------------------------------------------
def _im2col_3x3(x_nhwc, stride):
    n, h, w, c = x_nhwc.shape
    xp = jnp.pad(x_nhwc, ((0, 0), (1, 1), (1, 1), (0, 0)))
    ho = (h + 2 - 3) // stride + 1
    wo = (w + 2 - 3) // stride + 1
    cols = []
    for kh in range(3):
        for kw in range(3):
            cols.append(xp[:, kh:kh + stride * ho:stride,
                           kw:kw + stride * wo:stride, :])
    patches = jnp.stack(cols, axis=3)                 # (N, Ho, Wo, 9, C)
    return patches.reshape(n * ho * wo, 9 * c), ho, wo


def bottleneck_reference(x_nchw, params, in_channels, out_channels, stride=1):
    c = out_channels
    cexp = c * EXPANSION
    n, cin, h, w = x_nchw.shape
    xb = jnp.transpose(x_nchw, (0, 2, 3, 1)).astype(jnp.bfloat16)

    def mm(a, wf, b, relu):
        y = jnp.dot(a, wf, preferred_element_type=jnp.float32) + b
        return jnp.maximum(y, 0.0) if relu else y

    w1, b1 = _fold_bn(params["w1"].reshape(c, cin).T, *params["bn1"])
    h1 = mm(xb.reshape(n * h * w, cin), w1, b1, True).astype(jnp.bfloat16)
    h1 = h1.reshape(n, h, w, c)

    w2, b2 = _fold_bn(jnp.transpose(params["w2"], (2, 3, 1, 0)).reshape(9 * c, c),
                      *params["bn2"])
    patches, ho, wo = _im2col_3x3(h1, stride)
    h2 = mm(patches, w2, b2, True).astype(jnp.bfloat16)

    w3, b3 = _fold_bn(params["w3"].reshape(cexp, c).T, *params["bn3"])
    y = jnp.dot(h2, w3, preferred_element_type=jnp.float32) + b3
    if stride != 1 or cin != cexp:
        ws, bs = _fold_bn(params["ws"].reshape(cexp, cin).T, *params["bns"])
        xs = xb[:, ::stride, ::stride, :].reshape(n * ho * wo, cin)
        y = y + jnp.dot(xs, ws, preferred_element_type=jnp.float32) + bs
    else:
        y = y + xb.reshape(n * ho * wo, cexp).astype(jnp.float32)
    out = jnp.maximum(y, 0.0).astype(jnp.bfloat16)
    return jnp.transpose(out.reshape(n, ho, wo, cexp), (0, 3, 1, 2))


# --------------------------------------------------------------------------
if __name__ == "__main__":
    key = jax.random.PRNGKey(0)
    configs = [
        # (in_channels, out_channels, stride) on a (2, Cin, 16, 16) input
        (4, 4, 1),    # projection shortcut (channel expand), stride-1 conv kernel
        (16, 4, 1),   # identity shortcut (in == out*expansion), stride-1 conv kernel
        (8, 4, 2),    # downsampling block, direct stride-2 conv kernel
    ]
    H = W = 16
    for cin, cout, stride in configs:
        key, kx, kp = jax.random.split(key, 3)
        x = jax.random.normal(kx, (2, cin, H, W), jnp.float32)   # NCHW
        params = init_bottleneck_params(kp, cin, cout)

        y = jax.block_until_ready(bottleneck_forward(x, params, cin, cout, stride))
        y_ref = bottleneck_reference(x, params, cin, cout, stride)

        ho = (H + 2 - 3) // stride + 1
        assert y.shape == (2, cout * EXPANSION, ho, ho), y.shape
        assert jnp.allclose(y.astype(jnp.float32), y_ref.astype(jnp.float32),
                            atol=1e-2, rtol=1e-2), (
            f"mismatch vs reference for config {(cin, cout, stride)}")

    print("KERNEL_OK")
</pallas_src>

<mosaic_0001>
module attributes {stable_mosaic.version = 11 : i64} {
  func.func @_matmul_bias_kernel(%arg0: i32, %arg1: memref<256x4xbf16, #tpu.memory_space<vmem>>, %arg2: memref<4x4xbf16, #tpu.memory_space<vmem>>, %arg3: memref<1x4xf32, #tpu.memory_space<vmem>>, %arg4: memref<256x4xbf16, #tpu.memory_space<vmem>>) attributes {dimension_semantics = [#tpu.dimension_semantics<parallel>], iteration_bounds = array<i64: 2>, scalar_prefetch = 0 : i64, scratch_operands = 0 : i64, tpu.core_type = #tpu.core_type<tc>, window_params = [{transform_indices = @transform_0, window_bounds = array<i64: 256, 4>}, {pipeline_mode = #tpu.pipeline_mode<synchronous>, transform_indices = @transform_1, window_bounds = array<i64: 4, 4>}, {pipeline_mode = #tpu.pipeline_mode<synchronous>, transform_indices = @transform_2, window_bounds = array<i64: 1, 4>}, {transform_indices = @transform_3, window_bounds = array<i64: 256, 4>}]} {
    %c0 = arith.constant 0 : index
    %c0_0 = arith.constant 0 : index
    %0 = vector.load %arg1[%c0, %c0_0] : memref<256x4xbf16, #tpu.memory_space<vmem>>, vector<256x4xbf16>
    %c0_1 = arith.constant 0 : index
    %c0_2 = arith.constant 0 : index
    %1 = vector.load %arg2[%c0_1, %c0_2] : memref<4x4xbf16, #tpu.memory_space<vmem>>, vector<4x4xbf16>
    %cst = arith.constant dense<0.000000e+00> : vector<256x4xf32>
    %2 = tpu.matmul %0, %1, %cst {dimension_numbers = #tpu.dot_dimension_numbers<[1], [0], [0], [1], [0, 0, 1, 1], [], []>} : vector<256x4xbf16>, vector<4x4xbf16>, vector<256x4xf32> -> vector<256x4xf32>
    %c0_3 = arith.constant 0 : index
    %c0_4 = arith.constant 0 : index
    %3 = vector.load %arg3[%c0_3, %c0_4] : memref<1x4xf32, #tpu.memory_space<vmem>>, vector<1x4xf32>
    %4 = vector.broadcast %3 : vector<1x4xf32> to vector<256x4xf32>
    %5 = arith.addf %2, %4 : vector<256x4xf32>
    %cst_5 = arith.constant 0.000000e+00 : f32
    %6 = vector.broadcast %cst_5 : f32 to vector<256x4xf32>
    %7 = arith.maximumf %5, %6 : vector<256x4xf32>
    %8 = arith.truncf %7 : vector<256x4xf32> to vector<256x4xbf16>
    %c0_6 = arith.constant 0 : index
    %c0_7 = arith.constant 0 : index
    %9 = vector.load %arg4[%c0_6, %c0_7] : memref<256x4xbf16, #tpu.memory_space<vmem>>, vector<256x4xbf16>
    tpu.vector_store %arg4[%c0_6, %c0_7], %8 {strides = array<i32>} : memref<256x4xbf16, #tpu.memory_space<vmem>>, vector<256x4xbf16>,
    return
  }
  func.func @transform_0(%arg0: i32) -> (i32, i32) {
    %c0_i32 = arith.constant 0 : i32
    %c0_i32_0 = arith.constant 0 : i32
    return %arg0, %c0_i32 : i32, i32
  }
  func.func @transform_1(%arg0: i32) -> (i32, i32) {
    %c0_i32 = arith.constant 0 : i32
    %c0_i32_0 = arith.constant 0 : i32
    %c0_i32_1 = arith.constant 0 : i32
    return %c0_i32, %c0_i32_0 : i32, i32
  }
  func.func @transform_2(%arg0: i32) -> (i32, i32) {
    %c0_i32 = arith.constant 0 : i32
    %c0_i32_0 = arith.constant 0 : i32
    %c0_i32_1 = arith.constant 0 : i32
    return %c0_i32, %c0_i32_0 : i32, i32
  }
  func.func @transform_3(%arg0: i32) -> (i32, i32) {
    %c0_i32 = arith.constant 0 : i32
    %c0_i32_0 = arith.constant 0 : i32
    return %arg0, %c0_i32 : i32, i32
  }
}

</mosaic_0001>

<llo_original>
// kernel: tpu_custom_call.1
$region0: #{tpu_custom_call.1}
  #allocation0 [shape = 'u32[]', space=smem, size = 0x4, offset = 0x4, fixed_abs, tag = 'smem constant byte address 0x4 - core index']
  #allocation1 [shape = 'u32[144,128]{1,0:T(1,128)}', space=vmem, size = 0x12000, scoped, tag = 'internal scratch']
  %s0 = inlined_call_operand.vmem [shape: bf16[512,4], index: 0, kind: input, shape index: {}]
  %s1 = inlined_call_operand.vmem [shape: bf16[4,4], index: 1, kind: input, shape index: {}]
  %s2 = inlined_call_operand.vmem [shape: f32[1,4], index: 2, kind: input, shape index: {}]
  %s3 = inlined_call_operand.vmem [shape: bf16[512,4], index: 3, kind: output, shape index: {}]
  %s4 = sld [smem:[#allocation0]]
  $region45: #{tpu_custom_call.1} parent=0
    _
  %s6 = ssub.s32 1, %s4
  %s7 = scalar_select 0, %s6, %s4
  loop: start=0, step=1, limit=4
  $region2: #{tpu_custom_call.1} parent=0 // loop_pre_header
    _
  $region3: #{tpu_custom_call.1} parent=0 // loop_header
    %s9 = sphi 0, %s13
    %p10 = scmp.ge.s32.totalorder %s9, 4
    %s19 = sphi 0, %s21
    %s22 = sphi 0, %s19
    %s23 = sphi 0, %s22
    %s39 = sphi 0, %s23
    %s43 = sphi 0, %s43
    %s45 = sphi 0, %s43
    %s46 = sphi 0, %s45
    %s60 = sphi 0, %s46
    %s64 = sphi 0, %s64
    %s66 = sphi 0, %s64
    %s67 = sphi 0, %s66
    %s81 = sphi 0, %s67
    %s87 = sphi 0, %s89
    %s90 = sphi 0, %s87
    %s91 = sphi 0, %s90
    %s107 = sphi 0, %s91
  $region4: #{tpu_custom_call.1} parent=0 // loop_header_branch
    %12 = sbr.rel (%p10) target = $region8
  $region5: #{tpu_custom_call.1} parent=0 // loop_body
    %s14 = ssub.s32 %s9, 1
    %s15 = ssub.s32 %s9, 2
    %s16 = sadd.s32 %s9, 1
    %s17 = ssub.s32 %s9, %s16
    %p18 = scmp.eq.s32.totalorder %s17, 0
    %s20 = sadd.s32 %s19, 1
    %s21 = scalar_select %p18, %s19, %s20
    %p24 = pneg %p18
    %p25 = scmp.eq.s32.totalorder %s9, 1
    %p26 = por %p24, %p25
    %p27 = scmp.ne.s32.totalorder %s19, %s22
    %p28 = scmp.eq.s32.totalorder %s9, 0
    %p29 = por %p27, %p28
    %p30 = scmp.ne.s32.totalorder %s19, %s22
    %p31 = scmp.eq.s32.totalorder %s14, 1
    %p32 = por %p30, %p31
    %p33 = scmp.ne.s32.totalorder %s22, %s23
    %p34 = scmp.eq.s32.totalorder %s14, 0
    %p35 = por %p33, %p34
    %p36 = scmp.ne.s32.totalorder %s22, %s23
    %p37 = scmp.eq.s32.totalorder %s15, 1
    %p38 = por %p36, %p37
    %p40 = scmp.ne.s32.totalorder %s23, %s39
    %p41 = scmp.eq.s32.totalorder %s15, 0
    %p42 = por %p40, %p41
    %s44 = sadd.s32 %s43, 1
    %p47 = scmp.eq.s32.totalorder %s9, 1
    %p48 = scmp.ne.s32.totalorder %s43, %s45
    %p49 = scmp.eq.s32.totalorder %s9, 0
    %p50 = por %p48, %p49
    %p51 = scmp.ne.s32.totalorder %s43, %s45
    %p52 = scmp.eq.s32.totalorder %s14, 1
    %p53 = por %p51, %p52
    %p54 = scmp.ne.s32.totalorder %s45, %s46
    %p55 = scmp.eq.s32.totalorder %s14, 0
    %p56 = por %p54, %p55
    %p57 = scmp.ne.s32.totalorder %s45, %s46
    %p58 = scmp.eq.s32.totalorder %s15, 1
    %p59 = por %p57, %p58
    %p61 = scmp.ne.s32.totalorder %s46, %s60
    %p62 = scmp.eq.s32.totalorder %s15, 0
    %p63 = por %p61, %p62
    %s65 = sadd.s32 %s64, 1
    %p68 = scmp.eq.s32.totalorder %s9, 1
    %p69 = scmp.ne.s32.totalorder %s64, %s66
    %p70 = scmp.eq.s32.totalorder %s9, 0
    %p71 = por %p69, %p70
    %p72 = scmp.ne.s32.totalorder %s64, %s66
    %p73 = scmp.eq.s32.totalorder %s14, 1
    %p74 = por %p72, %p73
    %p75 = scmp.ne.s32.totalorder %s66, %s67
    %p76 = scmp.eq.s32.totalorder %s14, 0
    %p77 = por %p75, %p76
    %p78 = scmp.ne.s32.totalorder %s66, %s67
    %p79 = scmp.eq.s32.totalorder %s15, 1
    %p80 = por %p78, %p79
    %p82 = scmp.ne.s32.totalorder %s67, %s81
    %p83 = scmp.eq.s32.totalorder %s15, 0
    %p84 = por %p82, %p83
    %s85 = ssub.s32 %s9, %s16
    %p86 = scmp.eq.s32.totalorder %s85, 0
    %s88 = sadd.s32 %s87, 1
    %s89 = scalar_select %p86, %s87, %s88
    %p92 = pneg %p86
    %p93 = scmp.eq.s32.totalorder %s9, 1
    %p94 = por %p92, %p93
    %p95 = scmp.ne.s32.totalorder %s87, %s90
    %p96 = scmp.eq.s32.totalorder %s9, 0
    %p97 = por %p95, %p96
    %p98 = scmp.ne.s32.totalorder %s87, %s90
    %p99 = scmp.eq.s32.totalorder %s14, 1
    %p100 = por %p98, %p99
    %p101 = scmp.ne.s32.totalorder %s90, %s91
    %p102 = scmp.eq.s32.totalorder %s14, 0
    %p103 = por %p101, %p102
    %p104 = scmp.ne.s32.totalorder %s90, %s91
    %p105 = scmp.eq.s32.totalorder %s15, 1
    %p106 = por %p104, %p105
    %p108 = scmp.ne.s32.totalorder %s91, %s107
    %p109 = scmp.eq.s32.totalorder %s15, 0
    %p110 = por %p108, %p109
    %p111 = scmp.le.s32.totalorder 1, %s9
    %p112 = scmp.lt.s32.totalorder %s9, 3
    %p113 = pnand %p111, %p112
    %p114 = pneg %p113
    // Predicated region
    $region9: #{tpu_custom_call.1} parent=5 // pred_check
      _
    $region10: #{tpu_custom_call.1} parent=5 // pred_check_branch
      %116 = sbr.rel (%p113) target = $region12
    $region11: #{tpu_custom_call.1} parent=5 // pred_region
      %s117 = ssub.s32 %s9, 1
      // Predicated region
      $region13: #{tpu_custom_call.1} parent=11 // pred_check
        %p118 = pneg %p56
      $region14: #{tpu_custom_call.1} parent=11 // pred_check_branch
        %120 = sbr.rel (%p118) target = $region16
      $region15: #{tpu_custom_call.1} parent=11 // pred_region
        _
      $region16: #{tpu_custom_call.1} parent=11 // pred_fallthru
        _
      // Predicated region
      $region17: #{tpu_custom_call.1} parent=11 // pred_check
        %p121 = pneg %p77
      $region18: #{tpu_custom_call.1} parent=11 // pred_check_branch
        %123 = sbr.rel (%p121) target = $region20
      $region19: #{tpu_custom_call.1} parent=11 // pred_region
        _
      $region20: #{tpu_custom_call.1} parent=11 // pred_fallthru
        _
    $region12: #{tpu_custom_call.1} parent=5 // pred_fallthru
      _
    %p124 = scmp.lt.s32.totalorder %s9, 2
    // Predicated region
    $region21: #{tpu_custom_call.1} parent=5 // pred_check
      %p125 = pneg %p124
    $region22: #{tpu_custom_call.1} parent=5 // pred_check_branch
      %127 = sbr.rel (%p125) target = $region24
    $region23: #{tpu_custom_call.1} parent=5 // pred_region
      // Predicated region
      $region25: #{tpu_custom_call.1} parent=23 // pred_check
        %p128 = pneg %p29
      $region26: #{tpu_custom_call.1} parent=23 // pred_check_branch
        %130 = sbr.rel (%p128) target = $region28
      $region27: #{tpu_custom_call.1} parent=23 // pred_region
        %s131 = smul.u32 32, %s9
        %p132 = scmp.lt.s32.totalorder %s131, 63
        %s133 = scalar_select %p132, %s131, 63
        %s134 = smul.addr %s133, 4
        %s135 = scalar_lea.vmem %s0, %s134
        %s136 = smul.u32 32, %s9
      $region28: #{tpu_custom_call.1} parent=23 // pred_fallthru
        _
    $region24: #{tpu_custom_call.1} parent=5 // pred_fallthru
      _
    %p137 = scmp.le.s32.totalorder 1, %s9
    %p138 = scmp.lt.s32.totalorder %s9, 3
    %p139 = pnand %p137, %p138
    %p140 = pneg %p139
    // Predicated region
    $region29: #{tpu_custom_call.1} parent=5 // pred_check
      _
    $region30: #{tpu_custom_call.1} parent=5 // pred_check_branch
      %142 = sbr.rel (%p139) target = $region32
    $region31: #{tpu_custom_call.1} parent=5 // pred_region
      %s143 = ssub.s32 %s9, 1
      %s144 = smul.u32 32, %s14
      %p145 = scmp.lt.s32.totalorder %s144, 63
      %s146 = scalar_select %p145, %s144, 63
      %s147 = smul.addr %s146, 4
      %s148 = scalar_lea.vmem %s0, %s147
      %p149 = pneg %p35
      %p150 = pneg %p32
      %p151 = pneg %p56
      %p152 = pneg %p53
      %p153 = pneg %p77
      %p154 = pneg %p74
      %p155 = pneg %p103
      %p156 = pneg %p100
      %s157 = smul.u32 32, %s14
      %p158 = scmp.lt.s32.totalorder %s157, 63
      %s159 = scalar_select %p158, %s157, 63
      %s160 = smul.addr %s159, 4
      %s161 = scalar_lea.vmem %s3, %s160
      %s162 = smul.u32 32, %s14
      %p163 = scmp.lt.s32.totalorder %s162, 63
      %s164 = scalar_select %p163, %s162, 63
      %s165 = smul.addr %s164, 4
      %s166 = scalar_lea.vmem %s0, %s165
      %s167 = smul.u32 32, %s14
      %s168 = smul.u32 32, %s14
      %p169 = scmp.lt.s32.totalorder %s168, 63
      %s170 = scalar_select %p169, %s168, 63
      %s171 = smul.addr %s170, 4
      %s172 = scalar_lea.vmem %s3, %s171
      %s173 = smul.u32 32, %s14
      %v175 = vld [vmem:[%s166] sm:$0xf]
      %v176 = vld [vmem:[%s166 + $0x4] sm:$0xf]
      %v177 = vld [vmem:[%s166 + $0x8] sm:$0xf]
      %v178 = vld [vmem:[%s166 + $0xc] sm:$0xf]
      %v179 = vld [vmem:[%s166 + $0x10] sm:$0xf]
      %v180 = vld [vmem:[%s166 + $0x14] sm:$0xf]
      %v181 = vld [vmem:[%s166 + $0x18] sm:$0xf]
      %v182 = vld [vmem:[%s166 + $0x1c] sm:$0xf]
      %v183 = vld [vmem:[%s166 + $0x20] sm:$0xf]
      %v184 = vld [vmem:[%s166 + $0x24] sm:$0xf]
      %v185 = vld [vmem:[%s166 + $0x28] sm:$0xf]
      %v186 = vld [vmem:[%s166 + $0x2c] sm:$0xf]
      %v187 = vld [vmem:[%s166 + $0x30] sm:$0xf]
      %v188 = vld [vmem:[%s166 + $0x34] sm:$0xf]
      %v189 = vld [vmem:[%s166 + $0x38] sm:$0xf]
      %v190 = vld [vmem:[%s166 + $0x3c] sm:$0xf]
      %v191 = vld [vmem:[%s166 + $0x40] sm:$0xf]
      %v192 = vld [vmem:[%s166 + $0x44] sm:$0xf]
      %v193 = vld [vmem:[%s166 + $0x48] sm:$0xf]
      %v194 = vld [vmem:[%s166 + $0x4c] sm:$0xf]
      %v195 = vld [vmem:[%s166 + $0x50] sm:$0xf]
      %v196 = vld [vmem:[%s166 + $0x54] sm:$0xf]
      %v197 = vld [vmem:[%s166 + $0x58] sm:$0xf]
      %v198 = vld [vmem:[%s166 + $0x5c] sm:$0xf]
      %v199 = vld [vmem:[%s166 + $0x60] sm:$0xf]
      %v200 = vld [vmem:[%s166 + $0x64] sm:$0xf]
      %v201 = vld [vmem:[%s166 + $0x68] sm:$0xf]
      %v202 = vld [vmem:[%s166 + $0x6c] sm:$0xf]
      %v203 = vld [vmem:[%s166 + $0x70] sm:$0xf]
      %v204 = vld [vmem:[%s166 + $0x74] sm:$0xf]
      %v205 = vld [vmem:[%s166 + $0x78] sm:$0xf]
      %v206 = vld [vmem:[%s166 + $0x7c] sm:$0xf]
      %v207 = vld [vmem:[%s1] sm:$0x3]
      %v208 = vld [vmem:[%s2] sm:$0x1]
      %v210 = vlaneseq
      %v211 = vshrl.u32 %v210, 7
      %v212 = vsub.s32 0, %v211
      %v213 = vrot.slane %v208, %v212
      %v247 = vunpack.c.l.b16 %v175
      %v248 = vunpack.c.l.b16 %v176
      %v249 = vunpack.c.l.b16 %v177
      %v250 = vunpack.c.l.b16 %v178
      %v251 = vunpack.c.l.b16 %v179
      %v252 = vunpack.c.l.b16 %v180
      %v253 = vunpack.c.l.b16 %v181
      %v254 = vunpack.c.l.b16 %v182
      %v255 = vunpack.c.l.b16 %v183
      %v256 = vunpack.c.l.b16 %v184
      %v257 = vunpack.c.l.b16 %v185
      %v258 = vunpack.c.l.b16 %v186
      %v259 = vunpack.c.l.b16 %v187
      %v260 = vunpack.c.l.b16 %v188
      %v261 = vunpack.c.l.b16 %v189
      %v262 = vunpack.c.l.b16 %v190
      %v263 = vunpack.c.l.b16 %v191
      %v264 = vunpack.c.l.b16 %v192
      %v265 = vunpack.c.l.b16 %v193
      %v266 = vunpack.c.l.b16 %v194
      %v267 = vunpack.c.l.b16 %v195
      %v268 = vunpack.c.l.b16 %v196
      %v269 = vunpack.c.l.b16 %v197
      %v270 = vunpack.c.l.b16 %v198
      %v271 = vunpack.c.l.b16 %v199
      %v272 = vunpack.c.l.b16 %v200
      %v273 = vunpack.c.l.b16 %v201
      %v274 = vunpack.c.l.b16 %v202
      %v275 = vunpack.c.l.b16 %v203
      %v276 = vunpack.c.l.b16 %v204
      %v277 = vunpack.c.l.b16 %v205
      %v278 = vunpack.c.l.b16 %v206
      %v279 = vpack.c.b16 %v248, %v247
      %v280 = vpack.c.b16 %v250, %v249
      %v281 = vpack.c.b16 %v252, %v251
      %v282 = vpack.c.b16 %v254, %v253
      %v283 = vpack.c.b16 %v256, %v255
      %v284 = vpack.c.b16 %v258, %v257
      %v285 = vpack.c.b16 %v260, %v259
      %v286 = vpack.c.b16 %v262, %v261
      %v287 = vpack.c.b16 %v264, %v263
      %v288 = vpack.c.b16 %v266, %v265
      %v289 = vpack.c.b16 %v268, %v267
      %v290 = vpack.c.b16 %v270, %v269
      %v291 = vpack.c.b16 %v272, %v271
      %v292 = vpack.c.b16 %v274, %v273
      %v293 = vpack.c.b16 %v276, %v275
      %v294 = vpack.c.b16 %v278, %v277
      %vm295 = vcmask 31744
      %v297 = vsel %vm295, %v279, 0
      %v300 = vsel %vm295, %v280, 0
      %v303 = vsel %vm295, %v281, 0
      %v306 = vsel %vm295, %v282, 0
      %v309 = vsel %vm295, %v283, 0
      %v312 = vsel %vm295, %v284, 0
      %v315 = vsel %vm295, %v285, 0
      %v318 = vsel %vm295, %v286, 0
      %v321 = vsel %vm295, %v287, 0
      %v324 = vsel %vm295, %v288, 0
      %v327 = vsel %vm295, %v289, 0
      %v330 = vsel %vm295, %v290, 0
      %v333 = vsel %vm295, %v291, 0
      %v336 = vsel %vm295, %v292, 0
      %v339 = vsel %vm295, %v293, 0
      %v342 = vsel %vm295, %v294, 0
      %vm344 = vcmask 1041408
      %v346 = vsel %vm344, %v207, 0
      %348 = vmatprep.subr.bf16.mxu0 0
      %349 = vmatpush1.bf16.msra.mxu0 %v346
      %350 = vmatprep.subr.bf16.mxu0 0
      %351 = vmatpush1.bf16.msra.mxu0 0
      %352 = vmatprep.subr.bf16.mxu0 0
      %353 = vmatpush1.bf16.msra.mxu0 0
      %354 = vmatprep.subr.bf16.mxu0 0
      %355 = vmatpush1.bf16.msra.mxu0 0
      %356 = vmatprep.subr.bf16.mxu0 0
      %357 = vmatpush1.bf16.msra.mxu0 0
      %358 = vmatprep.subr.bf16.mxu0 0
      %359 = vmatpush1.bf16.msra.mxu0 0
      %360 = vmatprep.subr.bf16.mxu0 0
      %361 = vmatpush1.bf16.msra.mxu0 0
      %362 = vmatprep.subr.bf16.mxu0 0
      %363 = vmatpush1.bf16.msra.mxu0 0
      %364 = vmatprep.subr.bf16.mxu0 0
      %365 = vmatpush1.bf16.msra.mxu0 0
      %366 = vmatprep.subr.bf16.mxu0 0
      %367 = vmatpush1.bf16.msra.mxu0 0
      %368 = vmatprep.subr.bf16.mxu0 0
      %369 = vmatpush1.bf16.msra.mxu0 0
      %370 = vmatprep.subr.bf16.mxu0 0
      %371 = vmatpush1.bf16.msra.mxu0 0
      %372 = vmatprep.subr.bf16.mxu0 0
      %373 = vmatpush1.bf16.msra.mxu0 0
      %374 = vmatprep.subr.bf16.mxu0 0
      %375 = vmatpush1.bf16.msra.mxu0 0
      %376 = vmatprep.subr.bf16.mxu0 0
      %377 = vmatpush1.bf16.msra.mxu0 0
      %378 = vmatprep.subr.bf16.mxu0 0
      %379 = vmatpush1.bf16.msra.mxu0 0
      %380 = vmatprep.mubr.bf16.mxu0 0
      %381 = vmatmul.mubr.bf16.gmra.mrb[0].mxu0 %v297
      %v382 = vpop.f32.mrb[0].mxu0
      %v383 = vadd.f32 %v213, %v382
      %v384 = vpop.f32.mrb[0].mxu0
      %v385 = vpop.f32.mrb[0].mxu0
      %v386 = vadd.f32 %v213, %v385
      %v387 = vpop.f32.mrb[0].mxu0
      %388 = vmatprep.mubr.bf16.mxu0 0
      %389 = vmatmul.mubr.bf16.gmra.mrb[0].mxu0 %v300
      %v390 = vpop.f32.mrb[0].mxu0
      %v391 = vadd.f32 %v213, %v390
      %v392 = vpop.f32.mrb[0].mxu0
      %v393 = vpop.f32.mrb[0].mxu0
      %v394 = vadd.f32 %v213, %v393
      %v395 = vpop.f32.mrb[0].mxu0
      %396 = vmatprep.mubr.bf16.mxu0 0
      %397 = vmatmul.mubr.bf16.gmra.mrb[0].mxu0 %v303
      %v398 = vpop.f32.mrb[0].mxu0
      %v399 = vadd.f32 %v213, %v398
      %v400 = vpop.f32.mrb[0].mxu0
      %v401 = vpop.f32.mrb[0].mxu0
      %v402 = vadd.f32 %v213, %v401
      %v403 = vpop.f32.mrb[0].mxu0
      %404 = vmatprep.mubr.bf16.mxu0 0
      %405 = vmatmul.mubr.bf16.gmra.mrb[0].mxu0 %v306
      %v406 = vpop.f32.mrb[0].mxu0
      %v407 = vadd.f32 %v213, %v406
      %v408 = vpop.f32.mrb[0].mxu0
      %v409 = vpop.f32.mrb[0].mxu0
      %v410 = vadd.f32 %v213, %v409
      %v411 = vpop.f32.mrb[0].mxu0
      %412 = vmatprep.mubr.bf16.mxu0 0
      %413 = vmatmul.mubr.bf16.gmra.mrb[0].mxu0 %v309
      %v414 = vpop.f32.mrb[0].mxu0
      %v415 = vadd.f32 %v213, %v414
      %v416 = vpop.f32.mrb[0].mxu0
      %v417 = vpop.f32.mrb[0].mxu0
      %v418 = vadd.f32 %v213, %v417
      %v419 = vpop.f32.mrb[0].mxu0
      %420 = vmatprep.mubr.bf16.mxu0 0
      %421 = vmatmul.mubr.bf16.gmra.mrb[0].mxu0 %v312
      %v422 = vpop.f32.mrb[0].mxu0
      %v423 = vadd.f32 %v213, %v422
      %v424 = vpop.f32.mrb[0].mxu0
      %v425 = vpop.f32.mrb[0].mxu0
      %v426 = vadd.f32 %v213, %v425
      %v427 = vpop.f32.mrb[0].mxu0
      %428 = vmatprep.mubr.bf16.mxu0 0
      %429 = vmatmul.mubr.bf16.gmra.mrb[0].mxu0 %v315
      %v430 = vpop.f32.mrb[0].mxu0
      %v431 = vadd.f32 %v213, %v430
      %v432 = vpop.f32.mrb[0].mxu0
      %v433 = vpop.f32.mrb[0].mxu0
      %v434 = vadd.f32 %v213, %v433
      %v435 = vpop.f32.mrb[0].mxu0
      %436 = vmatprep.mubr.bf16.mxu0 0
      %437 = vmatmul.mubr.bf16.gmra.mrb[0].mxu0 %v318
      %v438 = vpop.f32.mrb[0].mxu0
      %v439 = vadd.f32 %v213, %v438
      %v440 = vpop.f32.mrb[0].mxu0
      %v441 = vpop.f32.mrb[0].mxu0
      %v442 = vadd.f32 %v213, %v441
      %v443 = vpop.f32.mrb[0].mxu0
      %444 = vmatprep.mubr.bf16.mxu0 0
      %445 = vmatmul.mubr.bf16.gmra.mrb[0].mxu0 %v321
      %v446 = vpop.f32.mrb[0].mxu0
      %v447 = vadd.f32 %v213, %v446
      %v448 = vpop.f32.mrb[0].mxu0
      %v449 = vpop.f32.mrb[0].mxu0
      %v450 = vadd.f32 %v213, %v449
      %v451 = vpop.f32.mrb[0].mxu0
      %452 = vmatprep.mubr.bf16.mxu0 0
      %453 = vmatmul.mubr.bf16.gmra.mrb[0].mxu0 %v324
      %v454 = vpop.f32.mrb[0].mxu0
      %v455 = vadd.f32 %v213, %v454
      %v456 = vpop.f32.mrb[0].mxu0
      %v457 = vpop.f32.mrb[0].mxu0
      %v458 = vadd.f32 %v213, %v457
      %v459 = vpop.f32.mrb[0].mxu0
      %460 = vmatprep.mubr.bf16.mxu0 0
      %461 = vmatmul.mubr.bf16.gmra.mrb[0].mxu0 %v327
      %v462 = vpop.f32.mrb[0].mxu0
      %v463 = vadd.f32 %v213, %v462
      %v464 = vpop.f32.mrb[0].mxu0
      %v465 = vpop.f32.mrb[0].mxu0
      %v466 = vadd.f32 %v213, %v465
      %v467 = vpop.f32.mrb[0].mxu0
      %468 = vmatprep.mubr.bf16.mxu0 0
      %469 = vmatmul.mubr.bf16.gmra.mrb[0].mxu0 %v330
      %v470 = vpop.f32.mrb[0].mxu0
      %v471 = vadd.f32 %v213, %v470
      %v472 = vpop.f32.mrb[0].mxu0
      %v473 = vpop.f32.mrb[0].mxu0
      %v474 = vadd.f32 %v213, %v473
      %v475 = vpop.f32.mrb[0].mxu0
      %476 = vmatprep.mubr.bf16.mxu0 0
      %477 = vmatmul.mubr.bf16.gmra.mrb[0].mxu0 %v333
      %v478 = vpop.f32.mrb[0].mxu0
      %v479 = vadd.f32 %v213, %v478
      %v480 = vpop.f32.mrb[0].mxu0
      %v481 = vpop.f32.mrb[0].mxu0
      %v482 = vadd.f32 %v213, %v481
      %v483 = vpop.f32.mrb[0].mxu0
      %484 = vmatprep.mubr.bf16.mxu0 0
      %485 = vmatmul.mubr.bf16.gmra.mrb[0].mxu0 %v336
      %v486 = vpop.f32.mrb[0].mxu0
      %v487 = vadd.f32 %v213, %v486
      %v488 = vpop.f32.mrb[0].mxu0
      %v489 = vpop.f32.mrb[0].mxu0
      %v490 = vadd.f32 %v213, %v489
      %v491 = vpop.f32.mrb[0].mxu0
      %492 = vmatprep.mubr.bf16.mxu0 0
      %493 = vmatmul.mubr.bf16.gmra.mrb[0].mxu0 %v339
      %v494 = vpop.f32.mrb[0].mxu0
      %v495 = vadd.f32 %v213, %v494
      %v496 = vpop.f32.mrb[0].mxu0
      %v497 = vpop.f32.mrb[0].mxu0
      %v498 = vadd.f32 %v213, %v497
      %v499 = vpop.f32.mrb[0].mxu0
      %500 = vmatprep.mubr.bf16.mxu0 0
      %501 = vmatmul.mubr.bf16.gmra.mrb[0].mxu0 %v342
      %v502 = vpop.f32.mrb[0].mxu0
      %v503 = vadd.f32 %v213, %v502
      %v504 = vpop.f32.mrb[0].mxu0
      %v505 = vpop.f32.mrb[0].mxu0
      %v506 = vadd.f32 %v213, %v505
      %v507 = vpop.f32.mrb[0].mxu0
      %508 = vdwg.mxu0
      %v509 = vmax.f32 %v383, 0.0
      %v510 = vmax.f32 %v386, 0.0
      %v511 = vmax.f32 %v391, 0.0
      %v512 = vmax.f32 %v394, 0.0
      %v513 = vmax.f32 %v399, 0.0
      %v514 = vmax.f32 %v402, 0.0
      %v515 = vmax.f32 %v407, 0.0
      %v516 = vmax.f32 %v410, 0.0
      %v517 = vmax.f32 %v415, 0.0
      %v518 = vmax.f32 %v418, 0.0
      %v519 = vmax.f32 %v423, 0.0
      %v520 = vmax.f32 %v426, 0.0
      %v521 = vmax.f32 %v431, 0.0
      %v522 = vmax.f32 %v434, 0.0
      %v523 = vmax.f32 %v439, 0.0
      %v524 = vmax.f32 %v442, 0.0
      %v525 = vmax.f32 %v447, 0.0
      %v526 = vmax.f32 %v450, 0.0
      %v527 = vmax.f32 %v455, 0.0
      %v528 = vmax.f32 %v458, 0.0
      %v529 = vmax.f32 %v463, 0.0
      %v530 = vmax.f32 %v466, 0.0
      %v531 = vmax.f32 %v471, 0.0
      %v532 = vmax.f32 %v474, 0.0
      %v533 = vmax.f32 %v479, 0.0
      %v534 = vmax.f32 %v482, 0.0
      %v535 = vmax.f32 %v487, 0.0
      %v536 = vmax.f32 %v490, 0.0
      %v537 = vmax.f32 %v495, 0.0
      %v538 = vmax.f32 %v498, 0.0
      %v539 = vmax.f32 %v503, 0.0
      %v540 = vmax.f32 %v506, 0.0
      %v541 = vpack.c.bf16 %v510, %v509
      %v542 = vpack.c.bf16 %v512, %v511
      %v543 = vpack.c.bf16 %v514, %v513
      %v544 = vpack.c.bf16 %v516, %v515
      %v545 = vpack.c.bf16 %v518, %v517
      %v546 = vpack.c.bf16 %v520, %v519
      %v547 = vpack.c.bf16 %v522, %v521
      %v548 = vpack.c.bf16 %v524, %v523
      %v549 = vpack.c.bf16 %v526, %v525
      %v550 = vpack.c.bf16 %v528, %v527
      %v551 = vpack.c.bf16 %v530, %v529
      %v552 = vpack.c.bf16 %v532, %v531
      %v553 = vpack.c.bf16 %v534, %v533
      %v554 = vpack.c.bf16 %v536, %v535
      %v555 = vpack.c.bf16 %v538, %v537
      %v556 = vpack.c.bf16 %v540, %v539
      %v573 = vunpack.c.l.b16 %v541
      %v574 = vunpack.c.h.b16 %v541
      %v575 = vunpack.c.l.b16 %v542
      %v576 = vunpack.c.h.b16 %v542
      %v577 = vunpack.c.l.b16 %v543
      %v578 = vunpack.c.h.b16 %v543
      %v579 = vunpack.c.l.b16 %v544
      %v580 = vunpack.c.h.b16 %v544
      %v581 = vunpack.c.l.b16 %v545
      %v582 = vunpack.c.h.b16 %v545
      %v583 = vunpack.c.l.b16 %v546
      %v584 = vunpack.c.h.b16 %v546
      %v585 = vunpack.c.l.b16 %v547
      %v586 = vunpack.c.h.b16 %v547
      %v587 = vunpack.c.l.b16 %v548
      %v588 = vunpack.c.h.b16 %v548
      %v589 = vunpack.c.l.b16 %v549
      %v590 = vunpack.c.h.b16 %v549
      %v591 = vunpack.c.l.b16 %v550
      %v592 = vunpack.c.h.b16 %v550
      %v593 = vunpack.c.l.b16 %v551
      %v594 = vunpack.c.h.b16 %v551
      %v595 = vunpack.c.l.b16 %v552
      %v596 = vunpack.c.h.b16 %v552
      %v597 = vunpack.c.l.b16 %v553
      %v598 = vunpack.c.h.b16 %v553
      %v599 = vunpack.c.l.b16 %v554
      %v600 = vunpack.c.h.b16 %v554
      %v601 = vunpack.c.l.b16 %v555
      %v602 = vunpack.c.h.b16 %v555
      %v603 = vunpack.c.l.b16 %v556
      %v604 = vunpack.c.h.b16 %v556
      %v605 = vpack.c.b16 %v573, %v573
      %v606 = vpack.c.b16 %v574, %v574
      %v607 = vpack.c.b16 %v575, %v575
      %v608 = vpack.c.b16 %v576, %v576
      %v609 = vpack.c.b16 %v577, %v577
      %v610 = vpack.c.b16 %v578, %v578
      %v611 = vpack.c.b16 %v579, %v579
      %v612 = vpack.c.b16 %v580, %v580
      %v613 = vpack.c.b16 %v581, %v581
      %v614 = vpack.c.b16 %v582, %v582
      %v615 = vpack.c.b16 %v583, %v583
      %v616 = vpack.c.b16 %v584, %v584
      %v617 = vpack.c.b16 %v585, %v585
      %v618 = vpack.c.b16 %v586, %v586
      %v619 = vpack.c.b16 %v587, %v587
      %v620 = vpack.c.b16 %v588, %v588
      %v621 = vpack.c.b16 %v589, %v589
      %v622 = vpack.c.b16 %v590, %v590
      %v623 = vpack.c.b16 %v591, %v591
      %v624 = vpack.c.b16 %v592, %v592
      %v625 = vpack.c.b16 %v593, %v593
      %v626 = vpack.c.b16 %v594, %v594
      %v627 = vpack.c.b16 %v595, %v595
      %v628 = vpack.c.b16 %v596, %v596
      %v629 = vpack.c.b16 %v597, %v597
      %v630 = vpack.c.b16 %v598, %v598
      %v631 = vpack.c.b16 %v599, %v599
      %v632 = vpack.c.b16 %v600, %v600
      %v633 = vpack.c.b16 %v601, %v601
      %v634 = vpack.c.b16 %v602, %v602
      %v635 = vpack.c.b16 %v603, %v603
      %v636 = vpack.c.b16 %v604, %v604
      %vm669 = vcmask 27648
      %670 = vst.msk [vmem:[%s172] sm:$0xf] %vm669, %v605
      %671 = vst.msk [vmem:[%s172 + $0x4] sm:$0xf] %vm669, %v606
      %672 = vst.msk [vmem:[%s172 + $0x8] sm:$0xf] %vm669, %v607
      %673 = vst.msk [vmem:[%s172 + $0xc] sm:$0xf] %vm669, %v608
      %674 = vst.msk [vmem:[%s172 + $0x10] sm:$0xf] %vm669, %v609
      %675 = vst.msk [vmem:[%s172 + $0x14] sm:$0xf] %vm669, %v610
      %676 = vst.msk [vmem:[%s172 + $0x18] sm:$0xf] %vm669, %v611
      %677 = vst.msk [vmem:[%s172 + $0x1c] sm:$0xf] %vm669, %v612
      %678 = vst.msk [vmem:[%s172 + $0x20] sm:$0xf] %vm669, %v613
      %679 = vst.msk [vmem:[%s172 + $0x24] sm:$0xf] %vm669, %v614
      %680 = vst.msk [vmem:[%s172 + $0x28] sm:$0xf] %vm669, %v615
      %681 = vst.msk [vmem:[%s172 + $0x2c] sm:$0xf] %vm669, %v616
      %682 = vst.msk [vmem:[%s172 + $0x30] sm:$0xf] %vm669, %v617
      %683 = vst.msk [vmem:[%s172 + $0x34] sm:$0xf] %vm669, %v618
      %684 = vst.msk [vmem:[%s172 + $0x38] sm:$0xf] %vm669, %v619
      %685 = vst.msk [vmem:[%s172 + $0x3c] sm:$0xf] %vm669, %v620
      %686 = vst.msk [vmem:[%s172 + $0x40] sm:$0xf] %vm669, %v621
      %687 = vst.msk [vmem:[%s172 + $0x44] sm:$0xf] %vm669, %v622
      %688 = vst.msk [vmem:[%s172 + $0x48] sm:$0xf] %vm669, %v623
      %689 = vst.msk [vmem:[%s172 + $0x4c] sm:$0xf] %vm669, %v624
      %690 = vst.msk [vmem:[%s172 + $0x50] sm:$0xf] %vm669, %v625
      %691 = vst.msk [vmem:[%s172 + $0x54] sm:$0xf] %vm669, %v626
      %692 = vst.msk [vmem:[%s172 + $0x58] sm:$0xf] %vm669, %v627
      %693 = vst.msk [vmem:[%s172 + $0x5c] sm:$0xf] %vm669, %v628
      %694 = vst.msk [vmem:[%s172 + $0x60] sm:$0xf] %vm669, %v629
      %695 = vst.msk [vmem:[%s172 + $0x64] sm:$0xf] %vm669, %v630
      %696 = vst.msk [vmem:[%s172 + $0x68] sm:$0xf] %vm669, %v631
      %697 = vst.msk [vmem:[%s172 + $0x6c] sm:$0xf] %vm669, %v632
      %698 = vst.msk [vmem:[%s172 + $0x70] sm:$0xf] %vm669, %v633
      %699 = vst.msk [vmem:[%s172 + $0x74] sm:$0xf] %vm669, %v634
      %700 = vst.msk [vmem:[%s172 + $0x78] sm:$0xf] %vm669, %v635
      %701 = vst.msk [vmem:[%s172 + $0x7c] sm:$0xf] %vm669, %v636
      %s702 = smul.u32 32, %s14
      %p703 = scmp.lt.s32.totalorder %s702, 63
      %s704 = scalar_select %p703, %s702, 63
      %s705 = smul.addr %s704, 4
      %s706 = scalar_lea.vmem %s3, %s705
      // Predicated region
      $region33: #{tpu_custom_call.1} parent=31 // pred_check
        %p707 = pneg %p100
      $region34: #{tpu_custom_call.1} parent=31 // pred_check_branch
        %709 = sbr.rel (%p707) target = $region36
      $region35: #{tpu_custom_call.1} parent=31 // pred_region
        %s710 = smul.u32 32, %s14
      $region36: #{tpu_custom_call.1} parent=31 // pred_fallthru
        _
    $region32: #{tpu_custom_call.1} parent=5 // pred_fallthru
      _
    %p711 = scmp.le.s32.totalorder 2, %s9
    // Predicated region
    $region37: #{tpu_custom_call.1} parent=5 // pred_check
      %p712 = pneg %p711
    $region38: #{tpu_custom_call.1} parent=5 // pred_check_branch
      %714 = sbr.rel (%p712) target = $region40
    $region39: #{tpu_custom_call.1} parent=5 // pred_region
      %s715 = ssub.s32 %s9, 2
      // Predicated region
      $region41: #{tpu_custom_call.1} parent=39 // pred_check
        %p716 = pneg %p106
      $region42: #{tpu_custom_call.1} parent=39 // pred_check_branch
        %718 = sbr.rel (%p716) target = $region44
      $region43: #{tpu_custom_call.1} parent=39 // pred_region
        %s719 = smul.u32 32, %s15
        %p720 = scmp.lt.s32.totalorder %s719, 63
        %s721 = scalar_select %p720, %s719, 63
        %s722 = smul.addr %s721, 4
        %s723 = scalar_lea.vmem %s3, %s722
      $region44: #{tpu_custom_call.1} parent=39 // pred_fallthru
        _
    $region40: #{tpu_custom_call.1} parent=5 // pred_fallthru
      _
  $region6: #{tpu_custom_call.1} parent=0 // loop_footer
    %s13 = sadd.s32 1, %s9
  $region7: #{tpu_custom_call.1} parent=0 // loop_footer_branch
    %8 = sbr.rel target = $region3
  $region8: #{tpu_custom_call.1} parent=0 // loop_exit
    _

</llo_original>
